<compile_context>
chip_gen: v7x
topology: tpu7x:2x2x1
jax: 0.10.0
libtpu: 0.0.40
codegen_flags: <defaults>
</compile_context>

<pallas_src>
import functools
import math

import jax
import jax.numpy as jnp
from jax import lax
from jax.experimental import pallas as pl
from jax.experimental.pallas import tpu as pltpu


def _maxpool3x3s2_kernel(x_ref, o_ref, nbuf, tbuf, *, top, left, h, w, ho, wo,
                         c_tile):
    """One (batch, channel-tile) block per grid step.

    x_ref : (c_tile, H, W)        input tile (H on sublanes, W on lanes)
    o_ref : (c_tile, Ho, Wo)      pooled tile
    nbuf  : (c_tile, Ho+1, W)     even-phase padded rows (incl. the zero pads)
    tbuf  : (c_tile, 2*Wo+1, Ho)  H-reduced tile, transposed (W on sublanes)
    """
    dt = o_ref.dtype

    # ---- H direction: max over padded rows {2i, 2i+1, 2i+2} -----------------
    # Padded row 2i+1 (window centre) is always a real input row.
    ctr = x_ref[:, pl.ds(1 - top, ho, stride=2), :]          # (c_tile, Ho, W)

    # nbuf[m] holds padded row 2m (m = 0..Ho); rows outside the input are the
    # zero padding itself, everything else is overwritten each step.
    g_count = ho if top == 0 else ho - 1
    if top == 1:
        nbuf[:, 0:1, :] = jnp.zeros((c_tile, 1, w), dt)      # top zero-pad row
    if g_count > 0:
        nbuf[:, top:top + g_count, :] = x_ref[:, pl.ds(top, g_count, stride=2), :]
    nbuf[:, ho:ho + 1, :] = jnp.zeros((c_tile, 1, w), dt)    # bottom zero-pad row

    hmax = jnp.maximum(jnp.maximum(ctr, nbuf[:, 0:ho, :]), nbuf[:, 1:ho + 1, :])

    # ---- W direction: transpose so W is on sublanes, then 3-tap stride-2 ----
    # tbuf row q holds padded column q (= x column + left); the zero-pad
    # column(s) are written explicitly, the interior is fully overwritten.
    if left == 1:
        tbuf[:, 0:1, :] = jnp.zeros((c_tile, 1, ho), dt)     # left zero-pad col
    tbuf[:, left:left + w, :] = jnp.transpose(hmax, (0, 2, 1))
    tbuf[:, 2 * wo:2 * wo + 1, :] = jnp.zeros((c_tile, 1, ho), dt)  # right pad col

    out_t = jnp.maximum(
        jnp.maximum(tbuf[:, pl.ds(0, wo, stride=2), :],
                    tbuf[:, pl.ds(1, wo, stride=2), :]),
        tbuf[:, pl.ds(2, wo, stride=2), :])                  # (c_tile, Wo, Ho)

    o_ref[...] = jnp.transpose(out_t, (0, 2, 1)).astype(dt)


def _vmem_limit_bytes():
    """Generation-aware VMEM budget (~60% of physical, clamped to [32, 96] MiB)."""
    try:
        cap = int(pltpu.get_tpu_info().vmem_capacity_bytes)
    except Exception:
        cap = 64 * 1024 * 1024
    return int(min(96 * 2**20, max(32 * 2**20, cap * 6 // 10)))


def _pick_c_tile(n, c, h, w, itemsize, block_budget_bytes):
    per_channel = max(1, h * w * itemsize)
    ct = max(1, min(c, block_budget_bytes // per_channel))
    # Once blocks are already big, keep a handful of grid steps for the
    # software pipeline / v7x megacore sharding.
    min_steps = 8
    if ct * per_channel >= (1 << 20) and n * ((c + ct - 1) // ct) < min_steps:
        ct = max(1, (n * c) // min_steps)
        ct = min(ct, c)
    # Largest divisor of c that is <= ct (no ragged channel blocks).
    while c % ct:
        ct -= 1
    return ct


def maxpool2d_same_padding(x, kernel_size=3, stride=2):
    """x: NCHW array.  Returns the NCHW pooled output matching the PyTorch module."""
    assert kernel_size == 3 and stride == 2, "specialized for the module defaults"
    n, c, h, w = x.shape

    # Padding amounts exactly as in the PyTorch forward().
    extra_h = (math.ceil(w / stride) - 1) * stride - w + kernel_size
    extra_v = (math.ceil(h / stride) - 1) * stride - h + kernel_size
    left = extra_h // 2
    top = extra_v // 2
    ho = (h + extra_v - kernel_size) // stride + 1     # padded H == 2*Ho + 1
    wo = (w + extra_h - kernel_size) // stride + 1     # padded W == 2*Wo + 1
    assert top in (0, 1) and left in (0, 1)

    itemsize = jnp.dtype(x.dtype).itemsize
    vmem_limit = _vmem_limit_bytes()
    # per-step VMEM ~= 2x in-block + 2x out-block + nbuf + tbuf + headroom ~= 5x in-block
    c_tile = _pick_c_tile(n, c, h, w, itemsize, vmem_limit // 6)

    kernel = functools.partial(
        _maxpool3x3s2_kernel,
        top=top, left=left, h=h, w=w, ho=ho, wo=wo, c_tile=c_tile,
    )

    in_bytes = n * c * h * w * itemsize
    out_bytes = n * c * ho * wo * itemsize
    cost = pl.CostEstimate(flops=8 * n * c * ho * wo, transcendentals=0,
                           bytes_accessed=in_bytes + out_bytes)

    return pl.pallas_call(
        kernel,
        out_shape=jax.ShapeDtypeStruct((n, c, ho, wo), x.dtype),
        grid=(n, c // c_tile),
        in_specs=[pl.BlockSpec((None, c_tile, h, w), lambda i, j: (i, j, 0, 0))],
        out_specs=pl.BlockSpec((None, c_tile, ho, wo), lambda i, j: (i, j, 0, 0)),
        scratch_shapes=[
            pltpu.VMEM((c_tile, ho + 1, w), x.dtype),       # H-stage neighbour rows
            pltpu.VMEM((c_tile, 2 * wo + 1, ho), x.dtype),  # transposed tile for W stage
        ],
        compiler_params=pltpu.CompilerParams(
            dimension_semantics=("parallel", "parallel"),
            vmem_limit_bytes=vmem_limit,
        ),
        cost_estimate=cost,
    )(x)


def _reference(x, kernel_size=3, stride=2):
    """Pure-JAX reference matching the PyTorch forward exactly."""
    h, w = x.shape[-2:]
    extra_h = (math.ceil(w / stride) - 1) * stride - w + kernel_size
    extra_v = (math.ceil(h / stride) - 1) * stride - h + kernel_size
    left = extra_h // 2
    right = extra_h - left
    top = extra_v // 2
    bottom = extra_v - top
    xp = jnp.pad(x, ((0, 0), (0, 0), (top, bottom), (left, right)))
    return lax.reduce_window(
        xp, -jnp.inf, lax.max,
        window_dimensions=(1, 1, kernel_size, kernel_size),
        window_strides=(1, 1, stride, stride),
        padding="VALID",
    )


if __name__ == "__main__":
    key = jax.random.PRNGKey(0)
    # Small NCHW input consistent with the module (MaxPool has no learned parameters).
    x = jax.random.normal(key, (2, 4, 16, 16), dtype=jnp.float32)

    out = maxpool2d_same_padding(x, kernel_size=3, stride=2)
    out = jax.block_until_ready(out)

    ref = _reference(x, kernel_size=3, stride=2)
    assert out.shape == ref.shape == (2, 4, 8, 8), (out.shape, ref.shape)
    assert jnp.allclose(out, ref), "Pallas maxpool mismatch vs reference"

    print("KERNEL_OK")
</pallas_src>

<mosaic_0001>
module attributes {stable_mosaic.version = 11 : i64} {
  func.func @_maxpool3x3s2_kernel(%arg0: i32, %arg1: i32, %arg2: memref<1x4x16x16xf32, #tpu.memory_space<vmem>>, %arg3: memref<1x4x8x8xf32, #tpu.memory_space<vmem>>, %arg4: memref<4x9x16xf32, #tpu.memory_space<vmem>>, %arg5: memref<4x17x8xf32, #tpu.memory_space<vmem>>) attributes {dimension_semantics = [#tpu.dimension_semantics<parallel>, #tpu.dimension_semantics<parallel>], iteration_bounds = array<i64: 2, 1>, scalar_prefetch = 0 : i64, scratch_operands = 2 : i64, tpu.core_type = #tpu.core_type<tc>, window_params = [{transform_indices = @transform_0, window_bounds = array<i64: 1, 4, 16, 16>}, {transform_indices = @transform_1, window_bounds = array<i64: 1, 4, 8, 8>}]} {
    %c0 = arith.constant 0 : index
    %c0_0 = arith.constant 0 : index
    %c1 = arith.constant 1 : index
    %c0_1 = arith.constant 0 : index
    %0 = tpu.strided_load %arg2[%c0, %c0_0, %c1, %c0_1] {strides = array<i32: 1, 1, 2, 1>} : memref<1x4x16x16xf32, #tpu.memory_space<vmem>>, vector<1x4x8x16xf32>
    %1 = vector.shape_cast %0 : vector<1x4x8x16xf32> to vector<4x8x16xf32>
    %c0_2 = arith.constant 0 : index
    %c0_3 = arith.constant 0 : index
    %c0_4 = arith.constant 0 : index
    %c0_5 = arith.constant 0 : index
    %2 = tpu.strided_load %arg2[%c0_2, %c0_3, %c0_4, %c0_5] {strides = array<i32: 1, 1, 2, 1>} : memref<1x4x16x16xf32, #tpu.memory_space<vmem>>, vector<1x4x8x16xf32>
    %3 = vector.shape_cast %2 : vector<1x4x8x16xf32> to vector<4x8x16xf32>
    %c0_6 = arith.constant 0 : index
    %c0_7 = arith.constant 0 : index
    %c0_8 = arith.constant 0 : index
    %4 = vector.load %arg4[%c0_6, %c0_7, %c0_8] : memref<4x9x16xf32, #tpu.memory_space<vmem>>, vector<4x8x16xf32>
    tpu.vector_store %arg4[%c0_6, %c0_7, %c0_8], %3 {strides = array<i32>} : memref<4x9x16xf32, #tpu.memory_space<vmem>>, vector<4x8x16xf32>,
    %cst = arith.constant 0.000000e+00 : f32
    %5 = vector.broadcast %cst : f32 to vector<4x1x16xf32>
    %c0_9 = arith.constant 0 : index
    %c8 = arith.constant 8 : index
    %c0_10 = arith.constant 0 : index
    %6 = vector.load %arg4[%c0_9, %c8, %c0_10] : memref<4x9x16xf32, #tpu.memory_space<vmem>>, vector<4x1x16xf32>
    tpu.vector_store %arg4[%c0_9, %c8, %c0_10], %5 {strides = array<i32>} : memref<4x9x16xf32, #tpu.memory_space<vmem>>, vector<4x1x16xf32>,
    %c0_11 = arith.constant 0 : index
    %c0_12 = arith.constant 0 : index
    %c0_13 = arith.constant 0 : index
    %7 = vector.load %arg4[%c0_11, %c0_12, %c0_13] : memref<4x9x16xf32, #tpu.memory_space<vmem>>, vector<4x8x16xf32>
    %8 = arith.maximumf %1, %7 : vector<4x8x16xf32>
    %c0_14 = arith.constant 0 : index
    %c1_15 = arith.constant 1 : index
    %c0_16 = arith.constant 0 : index
    %9 = vector.load %arg4[%c0_14, %c1_15, %c0_16] : memref<4x9x16xf32, #tpu.memory_space<vmem>>, vector<4x8x16xf32>
    %10 = arith.maximumf %8, %9 : vector<4x8x16xf32>
    %11 = tpu.transpose %10, [0, 2, 1] : vector<4x8x16xf32> -> vector<4x16x8xf32>
    %c0_17 = arith.constant 0 : index
    %c0_18 = arith.constant 0 : index
    %c0_19 = arith.constant 0 : index
    %12 = vector.load %arg5[%c0_17, %c0_18, %c0_19] : memref<4x17x8xf32, #tpu.memory_space<vmem>>, vector<4x16x8xf32>
    tpu.vector_store %arg5[%c0_17, %c0_18, %c0_19], %11 {strides = array<i32>} : memref<4x17x8xf32, #tpu.memory_space<vmem>>, vector<4x16x8xf32>,
    %cst_20 = arith.constant 0.000000e+00 : f32
    %13 = vector.broadcast %cst_20 : f32 to vector<4x1x8xf32>
    %c0_21 = arith.constant 0 : index
    %c16 = arith.constant 16 : index
    %c0_22 = arith.constant 0 : index
    %14 = vector.load %arg5[%c0_21, %c16, %c0_22] : memref<4x17x8xf32, #tpu.memory_space<vmem>>, vector<4x1x8xf32>
    tpu.vector_store %arg5[%c0_21, %c16, %c0_22], %13 {strides = array<i32>} : memref<4x17x8xf32, #tpu.memory_space<vmem>>, vector<4x1x8xf32>,
    %c0_23 = arith.constant 0 : index
    %c0_24 = arith.constant 0 : index
    %c0_25 = arith.constant 0 : index
    %15 = tpu.strided_load %arg5[%c0_23, %c0_24, %c0_25] {strides = array<i32: 1, 2, 1>} : memref<4x17x8xf32, #tpu.memory_space<vmem>>, vector<4x8x8xf32>
    %c0_26 = arith.constant 0 : index
    %c1_27 = arith.constant 1 : index
    %c0_28 = arith.constant 0 : index
    %16 = tpu.strided_load %arg5[%c0_26, %c1_27, %c0_28] {strides = array<i32: 1, 2, 1>} : memref<4x17x8xf32, #tpu.memory_space<vmem>>, vector<4x8x8xf32>
    %17 = arith.maximumf %15, %16 : vector<4x8x8xf32>
    %c0_29 = arith.constant 0 : index
    %c2 = arith.constant 2 : index
    %c0_30 = arith.constant 0 : index
    %18 = tpu.strided_load %arg5[%c0_29, %c2, %c0_30] {strides = array<i32: 1, 2, 1>} : memref<4x17x8xf32, #tpu.memory_space<vmem>>, vector<4x8x8xf32>
    %19 = arith.maximumf %17, %18 : vector<4x8x8xf32>
    %20 = tpu.transpose %19, [0, 2, 1] : vector<4x8x8xf32> -> vector<4x8x8xf32>
    %c0_31 = arith.constant 0 : index
    %c0_32 = arith.constant 0 : index
    %c0_33 = arith.constant 0 : index
    %c0_34 = arith.constant 0 : index
    %21 = vector.load %arg3[%c0_31, %c0_32, %c0_33, %c0_34] : memref<1x4x8x8xf32, #tpu.memory_space<vmem>>, vector<1x4x8x8xf32>
    %22 = vector.shape_cast %21 : vector<1x4x8x8xf32> to vector<4x8x8xf32>
    %23 = vector.shape_cast %20 : vector<4x8x8xf32> to vector<1x4x8x8xf32>
    tpu.vector_store %arg3[%c0_31, %c0_32, %c0_33, %c0_34], %23 {strides = array<i32>} : memref<1x4x8x8xf32, #tpu.memory_space<vmem>>, vector<1x4x8x8xf32>,
    return
  }
  func.func @transform_0(%arg0: i32, %arg1: i32) -> (i32, i32, i32, i32) {
    %c0_i32 = arith.constant 0 : i32
    %c0_i32_0 = arith.constant 0 : i32
    %c0_i32_1 = arith.constant 0 : i32
    return %arg0, %arg1, %c0_i32, %c0_i32_0 : i32, i32, i32, i32
  }
  func.func @transform_1(%arg0: i32, %arg1: i32) -> (i32, i32, i32, i32) {
    %c0_i32 = arith.constant 0 : i32
    %c0_i32_0 = arith.constant 0 : i32
    %c0_i32_1 = arith.constant 0 : i32
    return %arg0, %arg1, %c0_i32, %c0_i32_0 : i32, i32, i32, i32
  }
}

</mosaic_0001>

<llo_original>
// kernel: tpu_custom_call.1
$region0: #{tpu_custom_call.1}
  #allocation0 [shape = 'u32[]', space=smem, size = 0x4, offset = 0x4, fixed_abs, tag = 'smem constant byte address 0x4 - core index']
  #allocation1 [shape = 'u32[144,128]{1,0:T(1,128)}', space=vmem, size = 0x12000, scoped, tag = 'internal scratch']
  #allocation2 [shape = 'f32[4,9,16]{2,1,0:T(8,128)}', space=vmem, size = 0x8000, scoped, tag = 'scratch operand']
  #allocation3 [shape = 'f32[4,17,8]{2,1,0:T(8,128)}', space=vmem, size = 0xc000, scoped, tag = 'scratch operand']
  %s0 = inlined_call_operand.hbm [shape: f32[2,4,16,16], index: 0, kind: input, shape index: {}]
  %s1 = inlined_call_operand.hbm [shape: f32[2,4,8,8], index: 1, kind: output, shape index: {}]
  %s2 = sld [smem:[#allocation0]]
  $region41: #{tpu_custom_call.1} parent=0
    _
  %s4 = ssub.s32 1, %s2
  %s5 = scalar_select 0, %s4, %s2
  $region1: #{tpu_custom_call.1} parent=0
    #allocation4 [shape = 'u8[65536]{0}', space=vmem, size = 0x10000, scoped, tag = 'input window, operand 0']
    #allocation5 [shape = 's32[2]{0}', space=sflag, size = 0x8, scoped, tag = 'scoped memory for tpu_custom_call.1']
    #allocation6 [shape = 's32[2]{0}', space=sflag, size = 0x8, scoped, tag = 'scoped memory for tpu_custom_call.1']
    #allocation7 [shape = 'u8[32768]{0}', space=vmem, size = 0x8000, scoped, tag = 'output window, operand 0']
    %6 = vsyncpa [#allocation5], 0
    %s7 = scalar_lea.sflag [#allocation5], 1
    %8 = vsyncpa %s7, 0
    %9 = vsyncpa [#allocation6], 0
    %s10 = scalar_lea.sflag [#allocation6], 1
    %11 = vsyncpa %s10, 0
    loop: start=0, step=1, limit=4
    $region2: #{tpu_custom_call.1} parent=1 // loop_pre_header
      _
    $region3: #{tpu_custom_call.1} parent=1 // loop_header
      %s13 = sphi 0, %s17
      %p14 = scmp.ge.s32.totalorder %s13, 4
      %s20 = sphi 0, %s32
      %s21 = sphi 0, %s28
      %s22 = sphi 0, %s20
      %s23 = sphi 0, %s21
      %s24 = sphi 0, %s22
      %s25 = sphi 0, %s23
      %s37 = sphi 0, %s39
      %s40 = sphi 0, %s37
      %s41 = sphi 0, %s40
      %s57 = sphi 0, %s41
      %s65 = sphi 0, %s67
      %s68 = sphi 0, %s65
      %s69 = sphi 0, %s68
      %s85 = sphi 0, %s69
    $region4: #{tpu_custom_call.1} parent=1 // loop_header_branch
      %16 = sbr.rel (%p14) target = $region8
    $region5: #{tpu_custom_call.1} parent=1 // loop_body
      %s18 = ssub.s32 %s13, 1
      %s19 = ssub.s32 %s13, 2
      %s26 = sadd.s32 1, %s21
      %p27 = scmp.ge.s32.totalorder %s26, 1
      %s28 = scalar_select %p27, 0, %s26
      %s29 = sadd.s32 1, %s20
      %s30 = scalar_select %p27, %s29, %s20
      %p31 = scmp.ge.s32.totalorder %s30, 2
      %s32 = scalar_select %p31, 0, %s30
      %s33 = ssub.s32 %s20, %s32
      %s34 = ssub.s32 %s21, %s28
      %s35 = sor.u32 %s33, %s34
      %p36 = scmp.eq.s32.totalorder %s35, 0
      %s38 = sadd.s32 %s37, 1
      %s39 = scalar_select %p36, %s37, %s38
      %p42 = pneg %p36
      %p43 = scmp.eq.s32.totalorder %s13, 1
      %p44 = por %p42, %p43
      %p45 = scmp.ne.s32.totalorder %s37, %s40
      %p46 = scmp.eq.s32.totalorder %s13, 0
      %p47 = por %p45, %p46
      %p48 = scmp.ne.s32.totalorder %s37, %s40
      %p49 = scmp.eq.s32.totalorder %s18, 1
      %p50 = por %p48, %p49
      %p51 = scmp.ne.s32.totalorder %s40, %s41
      %p52 = scmp.eq.s32.totalorder %s18, 0
      %p53 = por %p51, %p52
      %p54 = scmp.ne.s32.totalorder %s40, %s41
      %p55 = scmp.eq.s32.totalorder %s19, 1
      %p56 = por %p54, %p55
      %p58 = scmp.ne.s32.totalorder %s41, %s57
      %p59 = scmp.eq.s32.totalorder %s19, 0
      %p60 = por %p58, %p59
      %s61 = ssub.s32 %s20, %s32
      %s62 = ssub.s32 %s21, %s28
      %s63 = sor.u32 %s61, %s62
      %p64 = scmp.eq.s32.totalorder %s63, 0
      %s66 = sadd.s32 %s65, 1
      %s67 = scalar_select %p64, %s65, %s66
      %p70 = pneg %p64
      %p71 = scmp.eq.s32.totalorder %s13, 1
      %p72 = por %p70, %p71
      %p73 = scmp.ne.s32.totalorder %s65, %s68
      %p74 = scmp.eq.s32.totalorder %s13, 0
      %p75 = por %p73, %p74
      %p76 = scmp.ne.s32.totalorder %s65, %s68
      %p77 = scmp.eq.s32.totalorder %s18, 1
      %p78 = por %p76, %p77
      %p79 = scmp.ne.s32.totalorder %s68, %s69
      %p80 = scmp.eq.s32.totalorder %s18, 0
      %p81 = por %p79, %p80
      %p82 = scmp.ne.s32.totalorder %s68, %s69
      %p83 = scmp.eq.s32.totalorder %s19, 1
      %p84 = por %p82, %p83
      %p86 = scmp.ne.s32.totalorder %s69, %s85
      %p87 = scmp.eq.s32.totalorder %s19, 0
      %p88 = por %p86, %p87
      %p89 = scmp.le.s32.totalorder 1, %s13
      %p90 = scmp.lt.s32.totalorder %s13, 3
      %p91 = pnand %p89, %p90
      %p92 = pneg %p91
      // Predicated region
      $region9: #{tpu_custom_call.1} parent=5 // pred_check
        _
      $region10: #{tpu_custom_call.1} parent=5 // pred_check_branch
        %94 = sbr.rel (%p91) target = $region12
      $region11: #{tpu_custom_call.1} parent=5 // pred_region
        %s95 = ssub.s32 %s13, 1
      $region12: #{tpu_custom_call.1} parent=5 // pred_fallthru
        _
      %p96 = scmp.lt.s32.totalorder %s13, 2
      // Predicated region
      $region13: #{tpu_custom_call.1} parent=5 // pred_check
        %p97 = pneg %p96
      $region14: #{tpu_custom_call.1} parent=5 // pred_check_branch
        %99 = sbr.rel (%p97) target = $region16
      $region15: #{tpu_custom_call.1} parent=5 // pred_region
        // Predicated region
        $region17: #{tpu_custom_call.1} parent=15 // pred_check
          %p100 = pneg %p47
        $region18: #{tpu_custom_call.1} parent=15 // pred_check_branch
          %102 = sbr.rel (%p100) target = $region20
        $region19: #{tpu_custom_call.1} parent=15 // pred_region
          %s103 = sand.u32 %s37, 1
          %s104 = scalar_lea.sflag [#allocation5], %s103
          %s105 = sand.u32 %s37, 1
          %s106 = smul.addr %s105, 64
          %s107 = scalar_lea.vmem [#allocation4], %s106
          %s108 = smul.u32 4, %s21
          %s110 = ssub.s32 1024, 1024
          %111 = vsyncadd %s104, %s110
          %s112 = smul.addr %s108, 2
          %s113 = smul.addr %s20, 8
          %s114 = sadd.s32 %s112, %s113
          %s115 = smul.addr %s114, 128
          %s116 = scalar_lea.hbm %s0, %s115
          %s117 = sshll.u32 %s107, 4
          %s118 = int_to_ptr.vmem [resolvable:$true] %s117
          %123 = dma.hbm_to_vmem [thread:$0]  %s116, 1024, %s118, %s104, 128, 128, 8
        $region20: #{tpu_custom_call.1} parent=15 // pred_fallthru
          _
      $region16: #{tpu_custom_call.1} parent=5 // pred_fallthru
        _
      %p124 = scmp.le.s32.totalorder 1, %s13
      %p125 = scmp.lt.s32.totalorder %s13, 3
      %p126 = pnand %p124, %p125
      %p127 = pneg %p126
      // Predicated region
      $region21: #{tpu_custom_call.1} parent=5 // pred_check
        _
      $region22: #{tpu_custom_call.1} parent=5 // pred_check_branch
        %129 = sbr.rel (%p126) target = $region24
      $region23: #{tpu_custom_call.1} parent=5 // pred_region
        %s130 = ssub.s32 %s13, 1
        %s131 = sand.u32 %s40, 1
        %s132 = scalar_lea.sflag [#allocation5], %s131
        %s133 = sand.u32 %s40, 1
        %s134 = smul.addr %s133, 64
        %s135 = scalar_lea.vmem [#allocation4], %s134
        // Predicated region
        $region25: #{tpu_custom_call.1} parent=23 // pred_check
          %p136 = pneg %p53
        $region26: #{tpu_custom_call.1} parent=23 // pred_check_branch
          %138 = sbr.rel (%p136) target = $region28
        $region27: #{tpu_custom_call.1} parent=23 // pred_region
          %139 = dma.done %s132, 1024
        $region28: #{tpu_custom_call.1} parent=23 // pred_fallthru
          _
        %s140 = sand.u32 %s40, 1
        %s141 = scalar_lea.sflag [#allocation5], %s140
        %s142 = sand.u32 %s40, 1
        %s143 = smul.addr %s142, 64
        %s144 = scalar_lea.vmem [#allocation4], %s143
        %p145 = pneg %p53
        %p146 = pneg %p50
        %p147 = pneg %p81
        %p148 = pneg %p78
        %s149 = sand.u32 %s68, 1
        %s150 = scalar_lea.sflag [#allocation6], %s149
        %s151 = sand.u32 %s68, 1
        %s152 = smul.addr %s151, 32
        %s153 = scalar_lea.vmem [#allocation7], %s152
        %s154 = smul.u32 4, %s23
        %s155 = smul.u32 4, %s23
        %s156 = scalar_lea.vmem %s135, 1 [#allocation4]
        %v157 = vld [vmem:[%s156] ss:$2 sm:$0xff]
        %s158 = scalar_lea.vmem %s135, 17 [#allocation4]
        %v159 = vld [vmem:[%s158] ss:$2 sm:$0xff]
        %s160 = scalar_lea.vmem %s135, 33 [#allocation4]
        %v161 = vld [vmem:[%s160] ss:$2 sm:$0xff]
        %s162 = scalar_lea.vmem %s135, 49 [#allocation4]
        %v163 = vld [vmem:[%s162] ss:$2 sm:$0xff]
        %v164 = vld [vmem:[%s135] ss:$2 sm:$0xff]
        %s165 = scalar_lea.vmem %s135, 16 [#allocation4]
        %v166 = vld [vmem:[%s165] ss:$2 sm:$0xff]
        %s167 = scalar_lea.vmem %s135, 32 [#allocation4]
        %v168 = vld [vmem:[%s167] ss:$2 sm:$0xff]
        %s169 = scalar_lea.vmem %s135, 48 [#allocation4]
        %v170 = vld [vmem:[%s169] ss:$2 sm:$0xff]
        %vm171 = vcmask 130048
        %172 = vst.msk [vmem:[#allocation2] sm:$0xff] %vm171, %v164
        %173 = vst.msk [vmem:[#allocation2 + $0x10] sm:$0xff] %vm171, %v166
        %174 = vst.msk [vmem:[#allocation2 + $0x20] sm:$0xff] %vm171, %v168
        %175 = vst.msk [vmem:[#allocation2 + $0x30] sm:$0xff] %vm171, %v170
        %vm176 = vcmask 122880
        %177 = vst.msk [vmem:[#allocation2 + $0x8] sm:$0x1] %vm176, 0.0
        %178 = vst.msk [vmem:[#allocation2 + $0x18] sm:$0x1] %vm176, 0.0
        %179 = vst.msk [vmem:[#allocation2 + $0x28] sm:$0x1] %vm176, 0.0
        %180 = vst.msk [vmem:[#allocation2 + $0x38] sm:$0x1] %vm176, 0.0
        %v181 = vld [vmem:[#allocation2] sm:$0xff]
        %v182 = vld [vmem:[#allocation2 + $0x10] sm:$0xff]
        %v183 = vld [vmem:[#allocation2 + $0x20] sm:$0xff]
        %v184 = vld [vmem:[#allocation2 + $0x30] sm:$0xff]
        %v185 = vmax.f32 %v157, %v181
        %v186 = vmax.f32 %v159, %v182
        %v187 = vmax.f32 %v161, %v183
        %v188 = vmax.f32 %v163, %v184
        %v189 = vld [vmem:[#allocation2 + $0x1] sm:$0xff]
        %v190 = vld [vmem:[#allocation2 + $0x11] sm:$0xff]
        %v191 = vld [vmem:[#allocation2 + $0x21] sm:$0xff]
        %v192 = vld [vmem:[#allocation2 + $0x31] sm:$0xff]
        %v193 = vmax.f32 %v185, %v189
        %v194 = vmax.f32 %v186, %v190
        %v195 = vmax.f32 %v187, %v191
        %v196 = vmax.f32 %v188, %v192
        %197 = vxpose.xlu0.b32.start [1/16] %v193, 128
        %198 = vxpose.xlu0.b32.cont [2/16] 0.0, 128
        %199 = vxpose.xlu0.b32.cont [3/16] 0.0, 128
        %200 = vxpose.xlu0.b32.cont [4/16] 0.0, 128
        %201 = vxpose.xlu0.b32.cont [5/16] 0.0, 128
        %202 = vxpose.xlu0.b32.cont [6/16] 0.0, 128
        %203 = vxpose.xlu0.b32.cont [7/16] 0.0, 128
        %204 = vxpose.xlu0.b32.cont [8/16] 0.0, 128
        %205 = vxpose.xlu0.b32.cont [9/16] 0.0, 128
        %206 = vxpose.xlu0.b32.cont [10/16] 0.0, 128
        %207 = vxpose.xlu0.b32.cont [11/16] 0.0, 128
        %208 = vxpose.xlu0.b32.cont [12/16] 0.0, 128
        %209 = vxpose.xlu0.b32.cont [13/16] 0.0, 128
        %210 = vxpose.xlu0.b32.cont [14/16] 0.0, 128
        %211 = vxpose.xlu0.b32.cont [15/16] 0.0, 128
        %212 = vxpose.xlu0.b32.end [16/16] 0.0, 128
        %v213 = vpop.trf.xlu0
        %v214 = vpop.trf.xlu0
        %v215 = vpop.trf.xlu0
        %v216 = vpop.trf.xlu0
        %v217 = vpop.trf.xlu0
        %v218 = vpop.trf.xlu0
        %v219 = vpop.trf.xlu0
        %v220 = vpop.trf.xlu0
        %v221 = vpop.trf.xlu0
        %v222 = vpop.trf.xlu0
        %v223 = vpop.trf.xlu0
        %v224 = vpop.trf.xlu0
        %v225 = vpop.trf.xlu0
        %v226 = vpop.trf.xlu0
        %v227 = vpop.trf.xlu0
        %v228 = vpop.trf.xlu0
        %229 = vxpose.xlu0.b32.start [1/16] %v194, 128
        %230 = vxpose.xlu0.b32.cont [2/16] 0.0, 128
        %231 = vxpose.xlu0.b32.cont [3/16] 0.0, 128
        %232 = vxpose.xlu0.b32.cont [4/16] 0.0, 128
        %233 = vxpose.xlu0.b32.cont [5/16] 0.0, 128
        %234 = vxpose.xlu0.b32.cont [6/16] 0.0, 128
        %235 = vxpose.xlu0.b32.cont [7/16] 0.0, 128
        %236 = vxpose.xlu0.b32.cont [8/16] 0.0, 128
        %237 = vxpose.xlu0.b32.cont [9/16] 0.0, 128
        %238 = vxpose.xlu0.b32.cont [10/16] 0.0, 128
        %239 = vxpose.xlu0.b32.cont [11/16] 0.0, 128
        %240 = vxpose.xlu0.b32.cont [12/16] 0.0, 128
        %241 = vxpose.xlu0.b32.cont [13/16] 0.0, 128
        %242 = vxpose.xlu0.b32.cont [14/16] 0.0, 128
        %243 = vxpose.xlu0.b32.cont [15/16] 0.0, 128
        %244 = vxpose.xlu0.b32.end [16/16] 0.0, 128
        %v245 = vpop.trf.xlu0
        %v246 = vpop.trf.xlu0
        %v247 = vpop.trf.xlu0
        %v248 = vpop.trf.xlu0
        %v249 = vpop.trf.xlu0
        %v250 = vpop.trf.xlu0
        %v251 = vpop.trf.xlu0
        %v252 = vpop.trf.xlu0
        %v253 = vpop.trf.xlu0
        %v254 = vpop.trf.xlu0
        %v255 = vpop.trf.xlu0
        %v256 = vpop.trf.xlu0
        %v257 = vpop.trf.xlu0
        %v258 = vpop.trf.xlu0
        %v259 = vpop.trf.xlu0
        %v260 = vpop.trf.xlu0
        %261 = vxpose.xlu0.b32.start [1/16] %v195, 128
        %262 = vxpose.xlu0.b32.cont [2/16] 0.0, 128
        %263 = vxpose.xlu0.b32.cont [3/16] 0.0, 128
        %264 = vxpose.xlu0.b32.cont [4/16] 0.0, 128
        %265 = vxpose.xlu0.b32.cont [5/16] 0.0, 128
        %266 = vxpose.xlu0.b32.cont [6/16] 0.0, 128
        %267 = vxpose.xlu0.b32.cont [7/16] 0.0, 128
        %268 = vxpose.xlu0.b32.cont [8/16] 0.0, 128
        %269 = vxpose.xlu0.b32.cont [9/16] 0.0, 128
        %270 = vxpose.xlu0.b32.cont [10/16] 0.0, 128
        %271 = vxpose.xlu0.b32.cont [11/16] 0.0, 128
        %272 = vxpose.xlu0.b32.cont [12/16] 0.0, 128
        %273 = vxpose.xlu0.b32.cont [13/16] 0.0, 128
        %274 = vxpose.xlu0.b32.cont [14/16] 0.0, 128
        %275 = vxpose.xlu0.b32.cont [15/16] 0.0, 128
        %276 = vxpose.xlu0.b32.end [16/16] 0.0, 128
        %v277 = vpop.trf.xlu0
        %v278 = vpop.trf.xlu0
        %v279 = vpop.trf.xlu0
        %v280 = vpop.trf.xlu0
        %v281 = vpop.trf.xlu0
        %v282 = vpop.trf.xlu0
        %v283 = vpop.trf.xlu0
        %v284 = vpop.trf.xlu0
        %v285 = vpop.trf.xlu0
        %v286 = vpop.trf.xlu0
        %v287 = vpop.trf.xlu0
        %v288 = vpop.trf.xlu0
        %v289 = vpop.trf.xlu0
        %v290 = vpop.trf.xlu0
        %v291 = vpop.trf.xlu0
        %v292 = vpop.trf.xlu0
        %293 = vxpose.xlu0.b32.start [1/16] %v196, 128
        %294 = vxpose.xlu0.b32.cont [2/16] 0.0, 128
        %295 = vxpose.xlu0.b32.cont [3/16] 0.0, 128
        %296 = vxpose.xlu0.b32.cont [4/16] 0.0, 128
        %297 = vxpose.xlu0.b32.cont [5/16] 0.0, 128
        %298 = vxpose.xlu0.b32.cont [6/16] 0.0, 128
        %299 = vxpose.xlu0.b32.cont [7/16] 0.0, 128
        %300 = vxpose.xlu0.b32.cont [8/16] 0.0, 128
        %301 = vxpose.xlu0.b32.cont [9/16] 0.0, 128
        %302 = vxpose.xlu0.b32.cont [10/16] 0.0, 128
        %303 = vxpose.xlu0.b32.cont [11/16] 0.0, 128
        %304 = vxpose.xlu0.b32.cont [12/16] 0.0, 128
        %305 = vxpose.xlu0.b32.cont [13/16] 0.0, 128
        %306 = vxpose.xlu0.b32.cont [14/16] 0.0, 128
        %307 = vxpose.xlu0.b32.cont [15/16] 0.0, 128
        %308 = vxpose.xlu0.b32.end [16/16] 0.0, 128
        %v309 = vpop.trf.xlu0
        %v310 = vpop.trf.xlu0
        %v311 = vpop.trf.xlu0
        %v312 = vpop.trf.xlu0
        %v313 = vpop.trf.xlu0
        %v314 = vpop.trf.xlu0
        %v315 = vpop.trf.xlu0
        %v316 = vpop.trf.xlu0
        %v317 = vpop.trf.xlu0
        %v318 = vpop.trf.xlu0
        %v319 = vpop.trf.xlu0
        %v320 = vpop.trf.xlu0
        %v321 = vpop.trf.xlu0
        %v322 = vpop.trf.xlu0
        %v323 = vpop.trf.xlu0
        %v324 = vpop.trf.xlu0
        %vm325 = vcmask 64512
        %326 = vst.msk [vmem:[#allocation3] sm:$0xff] %vm325, %v213
        %327 = vst.msk [vmem:[#allocation3 + $0x8] sm:$0xff] %vm325, %v214
        %328 = vst.msk [vmem:[#allocation3 + $0x18] sm:$0xff] %vm325, %v245
        %329 = vst.msk [vmem:[#allocation3 + $0x20] sm:$0xff] %vm325, %v246
        %330 = vst.msk [vmem:[#allocation3 + $0x30] sm:$0xff] %vm325, %v277
        %331 = vst.msk [vmem:[#allocation3 + $0x38] sm:$0xff] %vm325, %v278
        %332 = vst.msk [vmem:[#allocation3 + $0x48] sm:$0xff] %vm325, %v309
        %333 = vst.msk [vmem:[#allocation3 + $0x50] sm:$0xff] %vm325, %v310
        %vm334 = vcmask 57344
        %335 = vst.msk [vmem:[#allocation3 + $0x10] sm:$0x1] %vm334, 0.0
        %336 = vst.msk [vmem:[#allocation3 + $0x28] sm:$0x1] %vm334, 0.0
        %337 = vst.msk [vmem:[#allocation3 + $0x40] sm:$0x1] %vm334, 0.0
        %338 = vst.msk [vmem:[#allocation3 + $0x58] sm:$0x1] %vm334, 0.0
        %v339 = vld [vmem:[#allocation3] ss:$2 sm:$0xff]
        %s340 = scalar_lea.vmem [#allocation3], 24
        %v341 = vld [vmem:[%s340] ss:$2 sm:$0xff]
        %s342 = scalar_lea.vmem [#allocation3], 48
        %v343 = vld [vmem:[%s342] ss:$2 sm:$0xff]
        %s344 = scalar_lea.vmem [#allocation3], 72
        %v345 = vld [vmem:[%s344] ss:$2 sm:$0xff]
        %s346 = scalar_lea.vmem [#allocation3], 1
        %v347 = vld [vmem:[%s346] ss:$2 sm:$0xff]
        %s348 = scalar_lea.vmem [#allocation3], 25
        %v349 = vld [vmem:[%s348] ss:$2 sm:$0xff]
        %s350 = scalar_lea.vmem [#allocation3], 49
        %v351 = vld [vmem:[%s350] ss:$2 sm:$0xff]
        %s352 = scalar_lea.vmem [#allocation3], 73
        %v353 = vld [vmem:[%s352] ss:$2 sm:$0xff]
        %v354 = vmax.f32 %v339, %v347
        %v355 = vmax.f32 %v341, %v349
        %v356 = vmax.f32 %v343, %v351
        %v357 = vmax.f32 %v345, %v353
        %s358 = scalar_lea.vmem [#allocation3], 2
        %v359 = vld [vmem:[%s358] ss:$2 sm:$0xff]
        %s360 = scalar_lea.vmem [#allocation3], 26
        %v361 = vld [vmem:[%s360] ss:$2 sm:$0xff]
        %s362 = scalar_lea.vmem [#allocation3], 50
        %v363 = vld [vmem:[%s362] ss:$2 sm:$0xff]
        %s364 = scalar_lea.vmem [#allocation3], 74
        %v365 = vld [vmem:[%s364] ss:$2 sm:$0xff]
        %v366 = vmax.f32 %v354, %v359
        %v367 = vmax.f32 %v355, %v361
        %v368 = vmax.f32 %v356, %v363
        %v369 = vmax.f32 %v357, %v365
        %370 = vxpose.xlu0.b32.start [1/16] %v366, 128
        %371 = vxpose.xlu0.b32.cont [2/16] 0.0, 128
        %372 = vxpose.xlu0.b32.cont [3/16] 0.0, 128
        %373 = vxpose.xlu0.b32.cont [4/16] 0.0, 128
        %374 = vxpose.xlu0.b32.cont [5/16] 0.0, 128
        %375 = vxpose.xlu0.b32.cont [6/16] 0.0, 128
        %376 = vxpose.xlu0.b32.cont [7/16] 0.0, 128
        %377 = vxpose.xlu0.b32.cont [8/16] 0.0, 128
        %378 = vxpose.xlu0.b32.cont [9/16] 0.0, 128
        %379 = vxpose.xlu0.b32.cont [10/16] 0.0, 128
        %380 = vxpose.xlu0.b32.cont [11/16] 0.0, 128
        %381 = vxpose.xlu0.b32.cont [12/16] 0.0, 128
        %382 = vxpose.xlu0.b32.cont [13/16] 0.0, 128
        %383 = vxpose.xlu0.b32.cont [14/16] 0.0, 128
        %384 = vxpose.xlu0.b32.cont [15/16] 0.0, 128
        %385 = vxpose.xlu0.b32.end [16/16] 0.0, 128
        %v386 = vpop.trf.xlu0
        %v387 = vpop.trf.xlu0
        %v388 = vpop.trf.xlu0
        %v389 = vpop.trf.xlu0
        %v390 = vpop.trf.xlu0
        %v391 = vpop.trf.xlu0
        %v392 = vpop.trf.xlu0
        %v393 = vpop.trf.xlu0
        %v394 = vpop.trf.xlu0
        %v395 = vpop.trf.xlu0
        %v396 = vpop.trf.xlu0
        %v397 = vpop.trf.xlu0
        %v398 = vpop.trf.xlu0
        %v399 = vpop.trf.xlu0
        %v400 = vpop.trf.xlu0
        %v401 = vpop.trf.xlu0
        %402 = vxpose.xlu0.b32.start [1/16] %v367, 128
        %403 = vxpose.xlu0.b32.cont [2/16] 0.0, 128
        %404 = vxpose.xlu0.b32.cont [3/16] 0.0, 128
        %405 = vxpose.xlu0.b32.cont [4/16] 0.0, 128
        %406 = vxpose.xlu0.b32.cont [5/16] 0.0, 128
        %407 = vxpose.xlu0.b32.cont [6/16] 0.0, 128
        %408 = vxpose.xlu0.b32.cont [7/16] 0.0, 128
        %409 = vxpose.xlu0.b32.cont [8/16] 0.0, 128
        %410 = vxpose.xlu0.b32.cont [9/16] 0.0, 128
        %411 = vxpose.xlu0.b32.cont [10/16] 0.0, 128
        %412 = vxpose.xlu0.b32.cont [11/16] 0.0, 128
        %413 = vxpose.xlu0.b32.cont [12/16] 0.0, 128
        %414 = vxpose.xlu0.b32.cont [13/16] 0.0, 128
        %415 = vxpose.xlu0.b32.cont [14/16] 0.0, 128
        %416 = vxpose.xlu0.b32.cont [15/16] 0.0, 128
        %417 = vxpose.xlu0.b32.end [16/16] 0.0, 128
        %v418 = vpop.trf.xlu0
        %v419 = vpop.trf.xlu0
        %v420 = vpop.trf.xlu0
        %v421 = vpop.trf.xlu0
        %v422 = vpop.trf.xlu0
        %v423 = vpop.trf.xlu0
        %v424 = vpop.trf.xlu0
        %v425 = vpop.trf.xlu0
        %v426 = vpop.trf.xlu0
        %v427 = vpop.trf.xlu0
        %v428 = vpop.trf.xlu0
        %v429 = vpop.trf.xlu0
        %v430 = vpop.trf.xlu0
        %v431 = vpop.trf.xlu0
        %v432 = vpop.trf.xlu0
        %v433 = vpop.trf.xlu0
        %434 = vxpose.xlu0.b32.start [1/16] %v368, 128
        %435 = vxpose.xlu0.b32.cont [2/16] 0.0, 128
        %436 = vxpose.xlu0.b32.cont [3/16] 0.0, 128
        %437 = vxpose.xlu0.b32.cont [4/16] 0.0, 128
        %438 = vxpose.xlu0.b32.cont [5/16] 0.0, 128
        %439 = vxpose.xlu0.b32.cont [6/16] 0.0, 128
        %440 = vxpose.xlu0.b32.cont [7/16] 0.0, 128
        %441 = vxpose.xlu0.b32.cont [8/16] 0.0, 128
        %442 = vxpose.xlu0.b32.cont [9/16] 0.0, 128
        %443 = vxpose.xlu0.b32.cont [10/16] 0.0, 128
        %444 = vxpose.xlu0.b32.cont [11/16] 0.0, 128
        %445 = vxpose.xlu0.b32.cont [12/16] 0.0, 128
        %446 = vxpose.xlu0.b32.cont [13/16] 0.0, 128
        %447 = vxpose.xlu0.b32.cont [14/16] 0.0, 128
        %448 = vxpose.xlu0.b32.cont [15/16] 0.0, 128
        %449 = vxpose.xlu0.b32.end [16/16] 0.0, 128
        %v450 = vpop.trf.xlu0
        %v451 = vpop.trf.xlu0
        %v452 = vpop.trf.xlu0
        %v453 = vpop.trf.xlu0
        %v454 = vpop.trf.xlu0
        %v455 = vpop.trf.xlu0
        %v456 = vpop.trf.xlu0
        %v457 = vpop.trf.xlu0
        %v458 = vpop.trf.xlu0
        %v459 = vpop.trf.xlu0
        %v460 = vpop.trf.xlu0
        %v461 = vpop.trf.xlu0
        %v462 = vpop.trf.xlu0
        %v463 = vpop.trf.xlu0
        %v464 = vpop.trf.xlu0
        %v465 = vpop.trf.xlu0
        %466 = vxpose.xlu0.b32.start [1/16] %v369, 128
        %467 = vxpose.xlu0.b32.cont [2/16] 0.0, 128
        %468 = vxpose.xlu0.b32.cont [3/16] 0.0, 128
        %469 = vxpose.xlu0.b32.cont [4/16] 0.0, 128
        %470 = vxpose.xlu0.b32.cont [5/16] 0.0, 128
        %471 = vxpose.xlu0.b32.cont [6/16] 0.0, 128
        %472 = vxpose.xlu0.b32.cont [7/16] 0.0, 128
        %473 = vxpose.xlu0.b32.cont [8/16] 0.0, 128
        %474 = vxpose.xlu0.b32.cont [9/16] 0.0, 128
        %475 = vxpose.xlu0.b32.cont [10/16] 0.0, 128
        %476 = vxpose.xlu0.b32.cont [11/16] 0.0, 128
        %477 = vxpose.xlu0.b32.cont [12/16] 0.0, 128
        %478 = vxpose.xlu0.b32.cont [13/16] 0.0, 128
        %479 = vxpose.xlu0.b32.cont [14/16] 0.0, 128
        %480 = vxpose.xlu0.b32.cont [15/16] 0.0, 128
        %481 = vxpose.xlu0.b32.end [16/16] 0.0, 128
        %v482 = vpop.trf.xlu0
        %v483 = vpop.trf.xlu0
        %v484 = vpop.trf.xlu0
        %v485 = vpop.trf.xlu0
        %v486 = vpop.trf.xlu0
        %v487 = vpop.trf.xlu0
        %v488 = vpop.trf.xlu0
        %v489 = vpop.trf.xlu0
        %v490 = vpop.trf.xlu0
        %v491 = vpop.trf.xlu0
        %v492 = vpop.trf.xlu0
        %v493 = vpop.trf.xlu0
        %v494 = vpop.trf.xlu0
        %v495 = vpop.trf.xlu0
        %v496 = vpop.trf.xlu0
        %v497 = vpop.trf.xlu0
        %498 = vst.msk [vmem:[%s153] sm:$0xff] %vm325, %v386
        %499 = vst.msk [vmem:[%s153 + $0x8] sm:$0xff] %vm325, %v418
        %500 = vst.msk [vmem:[%s153 + $0x10] sm:$0xff] %vm325, %v450
        %501 = vst.msk [vmem:[%s153 + $0x18] sm:$0xff] %vm325, %v482
        %s502 = sand.u32 %s68, 1
        %s503 = scalar_lea.sflag [#allocation6], %s502
        %s504 = sand.u32 %s68, 1
        %s505 = smul.addr %s504, 32
        %s506 = scalar_lea.vmem [#allocation7], %s505
        // Predicated region
        $region29: #{tpu_custom_call.1} parent=23 // pred_check
          %p507 = pneg %p78
        $region30: #{tpu_custom_call.1} parent=23 // pred_check_branch
          %509 = sbr.rel (%p507) target = $region32
        $region31: #{tpu_custom_call.1} parent=23 // pred_region
          %s510 = smul.u32 4, %s23
          %s512 = ssub.s32 512, 512
          %513 = vsyncadd %s503, %s512
          %s514 = smul.addr %s22, 4
          %s515 = sadd.s32 %s510, %s514
          %s516 = smul.addr %s515, 128
          %s517 = scalar_lea.hbm %s1, %s516
          %s518 = sshll.u32 %s506, 4
          %s519 = int_to_ptr.vmem [resolvable:$true] %s518
          %524 = dma.vmem_to_hbm [thread:$0]  %s519, 512, %s517, %s503, 128, 128, 8
        $region32: #{tpu_custom_call.1} parent=23 // pred_fallthru
          _
      $region24: #{tpu_custom_call.1} parent=5 // pred_fallthru
        _
      %p525 = scmp.le.s32.totalorder 2, %s13
      // Predicated region
      $region33: #{tpu_custom_call.1} parent=5 // pred_check
        %p526 = pneg %p525
      $region34: #{tpu_custom_call.1} parent=5 // pred_check_branch
        %528 = sbr.rel (%p526) target = $region36
      $region35: #{tpu_custom_call.1} parent=5 // pred_region
        %s529 = ssub.s32 %s13, 2
        // Predicated region
        $region37: #{tpu_custom_call.1} parent=35 // pred_check
          %p530 = pneg %p84
        $region38: #{tpu_custom_call.1} parent=35 // pred_check_branch
          %532 = sbr.rel (%p530) target = $region40
        $region39: #{tpu_custom_call.1} parent=35 // pred_region
          %s533 = sand.u32 %s69, 1
          %s534 = scalar_lea.sflag [#allocation6], %s533
          %s535 = sand.u32 %s69, 1
          %s536 = smul.addr %s535, 32
          %s537 = scalar_lea.vmem [#allocation7], %s536
          %538 = dma.done %s534, 512
        $region40: #{tpu_custom_call.1} parent=35 // pred_fallthru
          _
      $region36: #{tpu_custom_call.1} parent=5 // pred_fallthru
        _
    $region6: #{tpu_custom_call.1} parent=1 // loop_footer
      %s17 = sadd.s32 1, %s13
    $region7: #{tpu_custom_call.1} parent=1 // loop_footer_branch
      %12 = sbr.rel target = $region3
    $region8: #{tpu_custom_call.1} parent=1 // loop_exit
      _
    %539 = vsyncpa [#allocation5], 1
    %s540 = scalar_lea.sflag [#allocation5], 1
    %541 = vsyncpa %s540, 1
    %542 = vsyncpa [#allocation6], 1
    %s543 = scalar_lea.sflag [#allocation6], 1
    %544 = vsyncpa %s543, 1

</llo_original>
